<compile_context>
chip_gen: v5e
topology: v5e:2x2
jax: 0.10.0
libtpu: 0.0.40
codegen_flags: <defaults>
</compile_context>

<pallas_src>
import math

import jax
import jax.numpy as jnp
import numpy as np
from jax.experimental import pallas as pl
from jax.experimental.pallas import tpu as pltpu

_EPS = 1e-12      # matches torch.nn.functional.normalize default eps
_LANE = 128       # TPU lane width
_SUBLANE = 8      # TPU sublane width


def _round_up(n, m):
    return ((n + m - 1) // m) * m


def _split_cosine_kernel(x_ref, wn_ref, sigma_ref, o_ref, xn_ref):
    """One (TB, TO) output tile.

    x_ref:     (TB, Dp)  VMEM  raw activations (zero-padded rows/cols)
    wn_ref:    (TO, Dp)  VMEM  rows already L2-normalized (zero padding rows)
    sigma_ref: (1,)      SMEM  scalar scale
    o_ref:     (TB, TO)  VMEM
    xn_ref:    (TB, Dp)  VMEM scratch: sigma * normalize(x), persists across
                         the class-tile axis (computed only at j == 0).
    """
    @pl.when(pl.program_id(1) == 0)
    def _():
        x = x_ref[...].astype(jnp.float32)
        # F.normalize(x, p=2, dim=1) == x / max(||x||, eps)
        #                            == x * rsqrt(max(sumsq, eps^2))
        sumsq = jnp.sum(x * x, axis=1, keepdims=True)
        inv = jax.lax.rsqrt(jnp.maximum(sumsq, _EPS * _EPS))
        # Fold sigma into the (B, D) side so no extra VPU pass over the
        # (B, O) output tiles.
        xn_ref[...] = (x * inv * sigma_ref[0]).astype(xn_ref.dtype)

    # Contract both operands on their last (lane) axis -> MXU fed directly,
    # no XLU transpose of the weight tile.  f32 accumulation on the MXU.
    out = jax.lax.dot_general(
        xn_ref[...], wn_ref[...],
        dimension_numbers=(((1,), (1,)), ((), ())),
        preferred_element_type=jnp.float32)
    o_ref[...] = out.astype(o_ref.dtype)


def prepare_cosine_weights(w1, w2):
    """One-time (per parameter update) weight prep.

    Concatenates fc1/fc2 rows, L2-normalizes each row (in f32), and zero-pads
    to lane-aligned (Op, Dp).  Call once and reuse across forward calls; do NOT
    redo this per batch.
    """
    w = jnp.concatenate([w1, w2], axis=0)           # (out1 + out2, in_features)
    wf = w.astype(jnp.float32)
    nrm = jnp.maximum(jnp.sqrt(jnp.sum(wf * wf, axis=1, keepdims=True)), _EPS)
    wn = (wf / nrm).astype(w.dtype)
    out_features, in_features = wn.shape
    op = _round_up(out_features, _LANE)
    dp = _round_up(in_features, _LANE)
    return jnp.pad(wn, ((0, op - out_features), (0, dp - in_features)))


def split_cosine_linear(x, wn_padded, sigma, out_features):
    """Pallas implementation of SplitCosineLinear.forward.

    x:          (B, in_features)
    wn_padded:  (Op, Dp) pre-normalized, lane-padded weight from
                prepare_cosine_weights(w1, w2)
    sigma:      (1,) learnable scale
    out_features: out1 + out2 (unpadded class count)
    """
    batch, in_features = x.shape
    op, dp = wn_padded.shape
    assert dp >= in_features and dp % _LANE == 0 and op % _LANE == 0

    # Batch tile: whole (sublane-padded) batch if small, else 256-row tiles.
    b8 = _round_up(max(batch, 1), _SUBLANE)
    if b8 <= 256:
        tb, bp = b8, b8
    else:
        tb, bp = 256, _round_up(batch, 256)
    # Class tile: multiple of 128 (lane-dense stores, MXU-friendly), <= 512,
    # dividing the padded class count.
    to = math.gcd(op, 512)

    xp = jnp.pad(x, ((0, bp - batch), (0, dp - in_features)))
    sigma = jnp.asarray(sigma, jnp.float32).reshape((1,))

    # TODO(synk): for very large in_features add a trailing "arbitrary" K grid
    # axis with an f32 VMEM accumulator instead of keeping all of Dp per tile.
    out = pl.pallas_call(
        _split_cosine_kernel,
        out_shape=jax.ShapeDtypeStruct((bp, op), x.dtype),
        grid=(bp // tb, op // to),
        in_specs=[
            pl.BlockSpec((tb, dp), lambda i, j: (i, 0)),
            pl.BlockSpec((to, dp), lambda i, j: (j, 0)),
            pl.BlockSpec(memory_space=pltpu.MemorySpace.SMEM),
        ],
        out_specs=pl.BlockSpec((tb, to), lambda i, j: (i, j)),
        scratch_shapes=[pltpu.VMEM((tb, dp), wn_padded.dtype)],
        compiler_params=pltpu.CompilerParams(
            dimension_semantics=("parallel", "arbitrary"),
            vmem_limit_bytes=32 * 1024 * 1024,
        ),
    )(xp, wn_padded, sigma)
    return out[:batch, :out_features]


def _reference_np(x, w1, w2, sigma):
    """Host float64 reference mirroring the PyTorch forward."""
    x = np.asarray(x, np.float64)
    w1 = np.asarray(w1, np.float64)
    w2 = np.asarray(w2, np.float64)
    s = float(np.asarray(sigma).reshape(-1)[0])

    def nr(v):
        return v / np.maximum(np.linalg.norm(v, axis=1, keepdims=True), _EPS)

    out1 = nr(x) @ nr(w1).T
    out2 = nr(x) @ nr(w2).T
    return s * np.concatenate([out1, out2], axis=1)


if __name__ == "__main__":
    def run_case(batch, in_features, out1, out2, seed):
        kx, k1, k2 = jax.random.split(jax.random.PRNGKey(seed), 3)
        # Deterministic init mirroring CosineLinear.reset_parameters:
        # weight ~ U(-stdv, stdv), stdv = 1/sqrt(in_features); sigma = 1.0
        stdv = 1.0 / math.sqrt(in_features)
        w1 = jax.random.uniform(k1, (out1, in_features), jnp.float32, -stdv, stdv)
        w2 = jax.random.uniform(k2, (out2, in_features), jnp.float32, -stdv, stdv)
        sigma = jnp.ones((1,), jnp.float32)
        x = jax.random.normal(kx, (batch, in_features), jnp.float32)

        wn = prepare_cosine_weights(w1, w2)           # once per parameter update
        out = split_cosine_linear(x, wn, sigma, out1 + out2)
        out = jax.block_until_ready(out)
        assert out.shape == (batch, out1 + out2)

        ref = _reference_np(x, w1, w2, sigma)
        np.testing.assert_allclose(np.asarray(out), ref, rtol=1e-4, atol=1e-4)

    # Small shapes consistent with the module (seed PRNGKey(0)).
    run_case(batch=8, in_features=32, out1=6, out2=10, seed=0)
    # Multi-tile case exercising the (batch-tile, class-tile) grid, padding,
    # and the scratch reuse across class tiles.
    run_case(batch=520, in_features=96, out1=200, out2=184, seed=1)

    print("KERNEL_OK")
</pallas_src>

<mosaic_0001>
module attributes {stable_mosaic.version = 11 : i64} {
  func.func @_split_cosine_kernel(%arg0: i32, %arg1: i32, %arg2: memref<8x128xf32, #tpu.memory_space<vmem>>, %arg3: memref<128x128xf32, #tpu.memory_space<vmem>>, %arg4: memref<1xf32, #tpu.memory_space<smem>>, %arg5: memref<8x128xf32, #tpu.memory_space<vmem>>, %arg6: memref<8x128xf32, #tpu.memory_space<vmem>>) attributes {dimension_semantics = [#tpu.dimension_semantics<parallel>, #tpu.dimension_semantics<arbitrary>], iteration_bounds = array<i64: 1, 1>, scalar_prefetch = 0 : i64, scratch_operands = 1 : i64, tpu.core_type = #tpu.core_type<tc>, window_params = [{transform_indices = @transform_0, window_bounds = array<i64: 8, 128>}, {transform_indices = @transform_1, window_bounds = array<i64: 128, 128>}, {transform_indices = @transform_2, window_bounds = array<i64: 1>}, {transform_indices = @transform_3, window_bounds = array<i64: 8, 128>}]} {
    %c0_i32 = arith.constant 0 : i32
    %0 = arith.cmpi eq, %arg1, %c0_i32 : i32
    %1 = arith.extui %0 : i1 to i32
    %c0_i32_0 = arith.constant 0 : i32
    %2 = arith.cmpi ne, %1, %c0_i32_0 : i32
    scf.if %2 {
      %c0_6 = arith.constant 0 : index
      %c0_7 = arith.constant 0 : index
      %7 = vector.load %arg2[%c0_6, %c0_7] : memref<8x128xf32, #tpu.memory_space<vmem>>, vector<8x128xf32>
      %8 = arith.mulf %7, %7 : vector<8x128xf32>
      %cst_8 = arith.constant dense<0.000000e+00> : vector<8xf32>
      %9 = vector.multi_reduction <add>, %8, %cst_8 [1] : vector<8x128xf32> to vector<8xf32>
      %10 = vector.shape_cast %9 : vector<8xf32> to vector<8x1xf32>
      %cst_9 = arith.constant 1.000000e-24 : f32
      %11 = vector.broadcast %cst_9 : f32 to vector<8x1xf32>
      %12 = arith.maximumf %10, %11 : vector<8x1xf32>
      %13 = math.rsqrt %12 : vector<8x1xf32>
      %14 = vector.broadcast %13 : vector<8x1xf32> to vector<8x128xf32>
      %15 = arith.mulf %7, %14 : vector<8x128xf32>
      %c0_10 = arith.constant 0 : index
      %16 = memref.load %arg4[%c0_10] : memref<1xf32, #tpu.memory_space<smem>>
      %17 = vector.broadcast %16 : f32 to vector<8x128xf32>
      %18 = arith.mulf %15, %17 : vector<8x128xf32>
      %c0_11 = arith.constant 0 : index
      %c0_12 = arith.constant 0 : index
      %19 = vector.load %arg6[%c0_11, %c0_12] : memref<8x128xf32, #tpu.memory_space<vmem>>, vector<8x128xf32>
      tpu.vector_store %arg6[%c0_11, %c0_12], %18 {strides = array<i32>} : memref<8x128xf32, #tpu.memory_space<vmem>>, vector<8x128xf32>,
    } else {
    }
    %c0 = arith.constant 0 : index
    %c0_1 = arith.constant 0 : index
    %3 = vector.load %arg6[%c0, %c0_1] : memref<8x128xf32, #tpu.memory_space<vmem>>, vector<8x128xf32>
    %c0_2 = arith.constant 0 : index
    %c0_3 = arith.constant 0 : index
    %4 = vector.load %arg3[%c0_2, %c0_3] : memref<128x128xf32, #tpu.memory_space<vmem>>, vector<128x128xf32>
    %cst = arith.constant dense<0.000000e+00> : vector<8x128xf32>
    %5 = tpu.matmul %3, %4, %cst {dimension_numbers = #tpu.dot_dimension_numbers<[1], [1], [0], [0], [0, 0, 1, 0], [], []>} : vector<8x128xf32>, vector<128x128xf32>, vector<8x128xf32> -> vector<8x128xf32>
    %c0_4 = arith.constant 0 : index
    %c0_5 = arith.constant 0 : index
    %6 = vector.load %arg5[%c0_4, %c0_5] : memref<8x128xf32, #tpu.memory_space<vmem>>, vector<8x128xf32>
    tpu.vector_store %arg5[%c0_4, %c0_5], %5 {strides = array<i32>} : memref<8x128xf32, #tpu.memory_space<vmem>>, vector<8x128xf32>,
    return
  }
  func.func @transform_0(%arg0: i32, %arg1: i32) -> (i32, i32) {
    %c0_i32 = arith.constant 0 : i32
    %c0_i32_0 = arith.constant 0 : i32
    return %arg0, %c0_i32 : i32, i32
  }
  func.func @transform_1(%arg0: i32, %arg1: i32) -> (i32, i32) {
    %c0_i32 = arith.constant 0 : i32
    %c0_i32_0 = arith.constant 0 : i32
    return %arg1, %c0_i32 : i32, i32
  }
  func.func @transform_2(%arg0: i32, %arg1: i32) -> i32 {
    %c0_i32 = arith.constant 0 : i32
    %c0_i32_0 = arith.constant 0 : i32
    return %c0_i32 : i32
  }
  func.func @transform_3(%arg0: i32, %arg1: i32) -> (i32, i32) {
    %c0_i32 = arith.constant 0 : i32
    return %arg0, %arg1 : i32, i32
  }
}

</mosaic_0001>

<llo_original>
// kernel: tpu_custom_call.1
$region0: #{tpu_custom_call.1}
  #allocation0 [shape = 'u32[]', space=smem, size = 0x4, offset = 0x4, fixed_abs, tag = 'smem constant byte address 0x4 - core index']
  #allocation1 [shape = 'u32[72,128]{1,0:T(1,128)}', space=vmem, size = 0x9000, scoped, tag = 'internal scratch']
  #allocation2 [shape = 'f32[8,128]{1,0:T(8,128)}', space=vmem, size = 0x1000, scoped, tag = 'scratch operand']
  #allocation3 [shape = 'f32[1]{0:T(128)S(6)}', space=smem, size = 0x200, scoped, tag = 'scoped memory for tpu_custom_call.1']
  %s0 = inlined_call_operand.hbm [shape: f32[8,128], index: 0, kind: input, shape index: {}]
  %s1 = inlined_call_operand.hbm [shape: f32[128,128], index: 1, kind: input, shape index: {}]
  %s2 = inlined_call_operand.<no memory space> [shape: f32[1], index: 2, kind: input, shape index: {}]
  %s3 = inlined_call_operand.hbm [shape: f32[8,128], index: 3, kind: output, shape index: {}]
  %s4 = sld [smem:[#allocation0]]
  $region34: #{tpu_custom_call.1} parent=0
    _
  %s6 = ssub.s32 1, %s4
  %s7 = scalar_select 0, %s6, %s4
  %8 = sst [smem:[#allocation3]] %s2
  $region1: #{tpu_custom_call.1} parent=0
    #allocation4 [shape = 'u8[4096]{0}', space=vmem, size = 0x1000, scoped, tag = 'input window, operand 0, single buffered']
    #allocation5 [shape = 's32[1]{0}', space=sflag, size = 0x4, scoped, tag = 'scoped memory for tpu_custom_call.1']
    #allocation6 [shape = 's32[1]{0}', space=sflag, size = 0x4, scoped, tag = 'scoped memory for tpu_custom_call.1']
    #allocation7 [shape = 'u8[65536]{0}', space=vmem, size = 0x10000, scoped, tag = 'input window, operand 1, single buffered']
    #allocation8 [shape = 's32[1]{0}', space=sflag, size = 0x4, scoped, tag = 'scoped memory for tpu_custom_call.1']
    #allocation9 [shape = 'u8[4096]{0}', space=vmem, size = 0x1000, scoped, tag = 'output window, operand 0, single buffered']
    %9 = vsyncpa [#allocation5], 0
    %10 = vsyncpa [#allocation8], 0
    %11 = vsyncpa [#allocation6], 0
    // Predicated region
    $region2: #{tpu_custom_call.1} parent=1 // pred_check
      _
    $region3: #{tpu_custom_call.1} parent=1 // pred_check_branch
      %13 = sbr.rel (0) target = $region5
    $region4: #{tpu_custom_call.1} parent=1 // pred_region
      %15 = vsyncadd [#allocation5], 0
      %s17 = sshll.u32 %s0, 4
      %s18 = int_to_ptr.hbm [resolvable:$true] %s17
      %s19 = sshll.u32 [#allocation4], 4
      %s20 = int_to_ptr.vmem [resolvable:$true] %s19
      %22 = dma.hbm_to_vmem [thread:$0]  %s18, 128, %s20, [#allocation5]
    $region5: #{tpu_custom_call.1} parent=1 // pred_fallthru
      _
    // Predicated region
    $region6: #{tpu_custom_call.1} parent=1 // pred_check
      _
    $region7: #{tpu_custom_call.1} parent=1 // pred_check_branch
      %24 = sbr.rel (0) target = $region9
    $region8: #{tpu_custom_call.1} parent=1 // pred_region
      %26 = vsyncadd [#allocation8], 0
      %s27 = sshll.u32 %s1, 4
      %s28 = int_to_ptr.hbm [resolvable:$true] %s27
      %s29 = sshll.u32 [#allocation7], 4
      %s30 = int_to_ptr.vmem [resolvable:$true] %s29
      %35 = dma.hbm_to_vmem [thread:$0]  %s28, 2048, %s30, [#allocation8], 128, 128, 8
    $region9: #{tpu_custom_call.1} parent=1 // pred_fallthru
      _
    // Predicated region
    $region10: #{tpu_custom_call.1} parent=1 // pred_check
      _
    $region11: #{tpu_custom_call.1} parent=1 // pred_check_branch
      %37 = sbr.rel (0) target = $region13
    $region12: #{tpu_custom_call.1} parent=1 // pred_region
      _
    $region13: #{tpu_custom_call.1} parent=1 // pred_fallthru
      _
    // Predicated region
    $region14: #{tpu_custom_call.1} parent=1 // pred_check
      _
    $region15: #{tpu_custom_call.1} parent=1 // pred_check_branch
      %39 = sbr.rel (0) target = $region17
    $region16: #{tpu_custom_call.1} parent=1 // pred_region
      %41 = dma.done [#allocation5], 128
    $region17: #{tpu_custom_call.1} parent=1 // pred_fallthru
      _
    // Predicated region
    $region18: #{tpu_custom_call.1} parent=1 // pred_check
      _
    $region19: #{tpu_custom_call.1} parent=1 // pred_check_branch
      %43 = sbr.rel (0) target = $region21
    $region20: #{tpu_custom_call.1} parent=1 // pred_region
      %45 = dma.done [#allocation8], 2048
    $region21: #{tpu_custom_call.1} parent=1 // pred_fallthru
      _
    %p46 = scmp.eq.s32.totalorder 0, 0
    // Predicated region
    $region22: #{tpu_custom_call.1} parent=1 // pred_check
      %p47 = pneg %p46
    $region23: #{tpu_custom_call.1} parent=1 // pred_check_branch
      %49 = sbr.rel (%p47) target = $region25
    $region24: #{tpu_custom_call.1} parent=1 // pred_region
      %v50 = vld [vmem:[#allocation4] sm:$0xff]
      %v51 = vmul.f32 %v50, %v50
      %52 = vadd.xlane.f32.xlu0 %v51
      %v53 = vpop.xlane.xlu0 %52
      %v54 = vmax.f32 %v53, 1e-24
      %v55 = vrsqrt.pop %v54
      %v56 = vmul.f32 %v55, %v54
      %v57 = vmul.f32 %v56, %v55
      %v58 = vmul.f32 0.5, %v57
      %v59 = vsub.f32 1.5, %v58
      %v60 = vmul.f32 %v55, %v59
      %vm61 = vweird.f32 %v54
      %vm62 = vweird.f32 %v55
      %vm63 = vmor %vm61, %vm62
      %v64 = vsel %vm63, %v55, %v60
      %v65 = vmul.f32 %v50, %v64
      %s66 = sld [smem:[#allocation3]]
      %v67 = vstv %s66
      %v68 = vmul.f32 %v65, %v67
      %69 = vst [vmem:[#allocation2] sm:$0xff] %v68
    $region25: #{tpu_custom_call.1} parent=1 // pred_fallthru
      _
    %v70 = vld [vmem:[#allocation2] sm:$0xff]
    %v71 = vld [vmem:[#allocation7] sm:$0xff]
    %v72 = vld [vmem:[#allocation7 + $0x8] sm:$0xff]
    %v73 = vld [vmem:[#allocation7 + $0x10] sm:$0xff]
    %v74 = vld [vmem:[#allocation7 + $0x18] sm:$0xff]
    %v75 = vld [vmem:[#allocation7 + $0x20] sm:$0xff]
    %v76 = vld [vmem:[#allocation7 + $0x28] sm:$0xff]
    %v77 = vld [vmem:[#allocation7 + $0x30] sm:$0xff]
    %v78 = vld [vmem:[#allocation7 + $0x38] sm:$0xff]
    %v79 = vld [vmem:[#allocation7 + $0x40] sm:$0xff]
    %v80 = vld [vmem:[#allocation7 + $0x48] sm:$0xff]
    %v81 = vld [vmem:[#allocation7 + $0x50] sm:$0xff]
    %v82 = vld [vmem:[#allocation7 + $0x58] sm:$0xff]
    %v83 = vld [vmem:[#allocation7 + $0x60] sm:$0xff]
    %v84 = vld [vmem:[#allocation7 + $0x68] sm:$0xff]
    %v85 = vld [vmem:[#allocation7 + $0x70] sm:$0xff]
    %v86 = vld [vmem:[#allocation7 + $0x78] sm:$0xff]
    %87 = vmatpush.xpose.msra.mxu0 %v86
    %88 = vmatpush.xpose.msra.mxu0 %v85
    %89 = vmatpush.xpose.msra.mxu0 %v84
    %90 = vmatpush.xpose.msra.mxu0 %v83
    %91 = vmatpush.xpose.msra.mxu0 %v82
    %92 = vmatpush.xpose.msra.mxu0 %v81
    %93 = vmatpush.xpose.msra.mxu0 %v80
    %94 = vmatpush.xpose.msra.mxu0 %v79
    %95 = vmatpush.xpose.msra.mxu0 %v78
    %96 = vmatpush.xpose.msra.mxu0 %v77
    %97 = vmatpush.xpose.msra.mxu0 %v76
    %98 = vmatpush.xpose.msra.mxu0 %v75
    %99 = vmatpush.xpose.msra.mxu0 %v74
    %100 = vmatpush.xpose.msra.mxu0 %v73
    %101 = vmatpush.xpose.msra.mxu0 %v72
    %102 = vmatpush.xpose.msra.mxu0 %v71
    %103 = vmatmul.f32.gmra.mxu0 %v70
    %v104 = vpop.f32.mrf.mxu0
    %v105 = vadd.f32 0.0, %v104
    %106 = vdwg.mxu0
    %107 = vst [vmem:[#allocation9] sm:$0xff] %v105
    // Predicated region
    $region26: #{tpu_custom_call.1} parent=1 // pred_check
      _
    $region27: #{tpu_custom_call.1} parent=1 // pred_check_branch
      %109 = sbr.rel (0) target = $region29
    $region28: #{tpu_custom_call.1} parent=1 // pred_region
      %111 = vsyncadd [#allocation6], 0
      %s113 = sshll.u32 [#allocation9], 4
      %s114 = int_to_ptr.vmem [resolvable:$true] %s113
      %s115 = sshll.u32 %s3, 4
      %s116 = int_to_ptr.hbm [resolvable:$true] %s115
      %118 = dma.vmem_to_hbm [thread:$0]  %s114, 128, %s116, [#allocation6]
    $region29: #{tpu_custom_call.1} parent=1 // pred_fallthru
      _
    // Predicated region
    $region30: #{tpu_custom_call.1} parent=1 // pred_check
      _
    $region31: #{tpu_custom_call.1} parent=1 // pred_check_branch
      %120 = sbr.rel (0) target = $region33
    $region32: #{tpu_custom_call.1} parent=1 // pred_region
      %122 = dma.done [#allocation6], 128
    $region33: #{tpu_custom_call.1} parent=1 // pred_fallthru
      _
    %123 = vsyncpa [#allocation5], 1
    %124 = vsyncpa [#allocation8], 1
    %125 = vsyncpa [#allocation6], 1

</llo_original>
